<compile_context>
chip_gen: v7x
topology: tpu7x:2x2x1
jax: 0.10.0
libtpu: 0.0.40
codegen_flags: <defaults>
</compile_context>

<pallas_src>
import jax
import jax.numpy as jnp
from jax.experimental import pallas as pl
from jax.experimental.pallas import tpu as pltpu

INPUT_DIM = 32
H1, H2 = 512, 256
OUT = 65
OUT_PAD = 128          # lane-dense padded output width
EPS = 1e-5


def _decoder_kernel(x_ref, w1_ref, b1_ref, w2_ref, b2_ref, w3_ref, b3_ref, o_ref):
    # Layer 1: Linear (+ folded eval-mode BN) + ReLU. Dropout = identity (eval).
    h1 = jnp.dot(x_ref[...], w1_ref[...], preferred_element_type=jnp.float32)
    h1 = jnp.maximum(h1 + b1_ref[...], 0.0)

    # Layer 2: Linear (+ folded eval-mode BN) + ReLU.
    h2 = jnp.dot(h1.astype(jnp.bfloat16), w2_ref[...],
                 preferred_element_type=jnp.float32)
    h2 = jnp.maximum(h2 + b2_ref[...], 0.0)

    # Layer 3: Linear + Sigmoid (columns >= OUT are zero-padded; consumer slices).
    h3 = jnp.dot(h2.astype(jnp.bfloat16), w3_ref[...],
                 preferred_element_type=jnp.float32) + b3_ref[...]
    o_ref[...] = jax.nn.sigmoid(h3).astype(o_ref.dtype)


def _round_up(n, m):
    return ((n + m - 1) // m) * m


def dense_decoder(x, params, *, max_tb=512, out_dtype=jnp.float32, unpad=True):
    """x: [B, INPUT_DIM] -> [B, OUT] (unpad=True) or [B_pad, OUT_PAD] (unpad=False).

    unpad=False skips the narrow-output re-copy: the first OUT columns (and
    first B rows) hold the module's result; trailing columns are sigmoid(0)=0.5
    padding that the consumer can ignore/slice lazily.
    """
    (w1, b1, w2, b2, w3, b3) = params
    B = x.shape[0]
    assert x.shape[1] == INPUT_DIM

    # --- Batch tiling -------------------------------------------------------
    # Big tiles fill the MXU M dimension; keep >= 2 grid steps when B >= 16 so
    # v7x's two TensorCores both get work. Sublane multiple is 16 for bf16
    # output tiles, 8 otherwise.
    sub = 16 if jnp.dtype(out_dtype).itemsize < 4 else 8
    steps = pl.cdiv(B, max_tb)
    if B >= 2 * sub:
        steps = max(steps, 2)
    tb = _round_up(pl.cdiv(B, steps), sub)
    b_pad = steps * tb

    # Feed the MXU bf16 directly (halves input DMA); zero-pad ragged batches.
    x = x.astype(jnp.bfloat16)
    if b_pad != B:
        x = jnp.pad(x, ((0, b_pad - B), (0, 0)))

    out = pl.pallas_call(
        _decoder_kernel,
        out_shape=jax.ShapeDtypeStruct((b_pad, OUT_PAD), out_dtype),
        grid_spec=pl.GridSpec(
            grid=(steps,),
            in_specs=[
                pl.BlockSpec((tb, INPUT_DIM), lambda i: (i, 0)),
                # Weights/biases: constant block index -> DMA'd once, stay
                # VMEM-resident across all batch tiles.
                pl.BlockSpec((INPUT_DIM, H1), lambda i: (0, 0)),
                pl.BlockSpec((1, H1), lambda i: (0, 0)),
                pl.BlockSpec((H1, H2), lambda i: (0, 0)),
                pl.BlockSpec((1, H2), lambda i: (0, 0)),
                pl.BlockSpec((H2, OUT_PAD), lambda i: (0, 0)),
                pl.BlockSpec((1, OUT_PAD), lambda i: (0, 0)),
            ],
            out_specs=pl.BlockSpec((tb, OUT_PAD), lambda i: (i, 0)),
        ),
        compiler_params=pltpu.CompilerParams(
            dimension_semantics=("parallel",)),
    )(x, w1, b1, w2, b2, w3, b3)

    if unpad:
        return out[:B, :OUT]
    return out


def init_params(key):
    """Deterministic synthetic params mirroring the PyTorch module's shapes,
    with eval-mode BatchNorm folded into the (bf16) weights and (f32) biases."""
    ks = jax.random.split(key, 12)

    def linear(kw, kb, fan_in, fan_out):
        bound = 1.0 / jnp.sqrt(fan_in)
        w = jax.random.uniform(kw, (fan_in, fan_out), jnp.float32, -bound, bound)
        b = jax.random.uniform(kb, (fan_out,), jnp.float32, -bound, bound)
        return w, b

    w1, lb1 = linear(ks[0], ks[1], INPUT_DIM, H1)
    w2, lb2 = linear(ks[2], ks[3], H1, H2)
    w3, lb3 = linear(ks[4], ks[5], H2, OUT)

    # BatchNorm1d params (gamma, beta) and running stats (mean, var).
    g1 = jax.random.uniform(ks[6], (H1,), jnp.float32, 0.5, 1.5)
    be1 = jax.random.uniform(ks[7], (H1,), jnp.float32, -0.5, 0.5)
    m1 = jax.random.uniform(ks[8], (H1,), jnp.float32, -0.1, 0.1)
    v1 = jax.random.uniform(ks[9], (H1,), jnp.float32, 0.5, 1.5)

    g2 = jax.random.uniform(ks[10], (H2,), jnp.float32, 0.5, 1.5)
    be2 = jax.random.uniform(ks[11], (H2,), jnp.float32, -0.5, 0.5)
    m2 = jnp.zeros((H2,), jnp.float32)
    v2 = jnp.ones((H2,), jnp.float32)

    # Fold Linear-bias + BatchNorm (eval mode) into the weights and a shift:
    #   BN(z) = gamma*(z - mean)/sqrt(var+eps) + beta, with z = x@W + lb
    #   => x@(W*s) + (lb - mean)*s + beta,  s = gamma/sqrt(var+eps)
    s1 = g1 / jnp.sqrt(v1 + EPS)
    w1f = (w1 * s1[None, :]).astype(jnp.bfloat16)
    b1f = ((lb1 - m1) * s1 + be1).reshape(1, H1)

    s2 = g2 / jnp.sqrt(v2 + EPS)
    w2f = (w2 * s2[None, :]).astype(jnp.bfloat16)
    b2f = ((lb2 - m2) * s2 + be2).reshape(1, H2)

    # Zero-pad the final layer to a lane-dense width (65 -> 128).
    w3p = jnp.zeros((H2, OUT_PAD), jnp.float32).at[:, :OUT].set(w3).astype(jnp.bfloat16)
    b3p = jnp.zeros((1, OUT_PAD), jnp.float32).at[0, :OUT].set(lb3)

    return (w1f, b1f, w2f, b2f, w3p, b3p)


def reference(x, params):
    """Pure-JAX reference mirroring the kernel's bf16-weight math."""
    (w1, b1, w2, b2, w3, b3) = params
    h1 = jnp.maximum(
        jnp.dot(x.astype(jnp.bfloat16), w1, preferred_element_type=jnp.float32) + b1, 0.0)
    h2 = jnp.maximum(
        jnp.dot(h1.astype(jnp.bfloat16), w2, preferred_element_type=jnp.float32) + b2, 0.0)
    h3 = jnp.dot(h2.astype(jnp.bfloat16), w3, preferred_element_type=jnp.float32) + b3
    return jax.nn.sigmoid(h3)[:, :OUT]


if __name__ == "__main__":
    key = jax.random.PRNGKey(0)
    kx, kp = jax.random.split(key)

    B = 64            # small demo batch -> 2 grid steps of 32 rows each
    x = jax.random.normal(kx, (B, INPUT_DIM), jnp.float32)
    params = init_params(kp)

    ref = reference(x, params)

    # Fast path: lane-dense padded buffer, no wrapper-side narrow re-copy.
    out_padded = jax.block_until_ready(dense_decoder(x, params, unpad=False))
    assert out_padded.shape[1] == OUT_PAD
    assert jnp.allclose(out_padded[:B, :OUT], ref, atol=2e-3, rtol=2e-3), \
        float(jnp.max(jnp.abs(out_padded[:B, :OUT] - ref)))

    # Module-exact output shape (B, 65).
    out = jax.block_until_ready(dense_decoder(x, params))
    assert out.shape == (B, OUT)
    assert jnp.allclose(out, ref, atol=2e-3, rtol=2e-3), \
        float(jnp.max(jnp.abs(out - ref)))

    # Optional bf16 output (halves the dominant output-store HBM traffic).
    out_bf16 = jax.block_until_ready(
        dense_decoder(x, params, out_dtype=jnp.bfloat16, unpad=False))
    assert jnp.allclose(out_bf16[:B, :OUT].astype(jnp.float32), ref,
                        atol=8e-3, rtol=8e-3), \
        float(jnp.max(jnp.abs(out_bf16[:B, :OUT].astype(jnp.float32) - ref)))

    print("KERNEL_OK")
</pallas_src>

<mosaic_0001>
module attributes {stable_mosaic.version = 11 : i64} {
  func.func @_decoder_kernel(%arg0: i32, %arg1: memref<32x32xbf16, #tpu.memory_space<vmem>>, %arg2: memref<32x512xbf16, #tpu.memory_space<vmem>>, %arg3: memref<1x512xf32, #tpu.memory_space<vmem>>, %arg4: memref<512x256xbf16, #tpu.memory_space<vmem>>, %arg5: memref<1x256xf32, #tpu.memory_space<vmem>>, %arg6: memref<256x128xbf16, #tpu.memory_space<vmem>>, %arg7: memref<1x128xf32, #tpu.memory_space<vmem>>, %arg8: memref<32x128xf32, #tpu.memory_space<vmem>>) attributes {dimension_semantics = [#tpu.dimension_semantics<parallel>], iteration_bounds = array<i64: 2>, scalar_prefetch = 0 : i64, scratch_operands = 0 : i64, tpu.core_type = #tpu.core_type<tc>, window_params = [{transform_indices = @transform_0, window_bounds = array<i64: 32, 32>}, {pipeline_mode = #tpu.pipeline_mode<synchronous>, transform_indices = @transform_1, window_bounds = array<i64: 32, 512>}, {pipeline_mode = #tpu.pipeline_mode<synchronous>, transform_indices = @transform_2, window_bounds = array<i64: 1, 512>}, {pipeline_mode = #tpu.pipeline_mode<synchronous>, transform_indices = @transform_3, window_bounds = array<i64: 512, 256>}, {pipeline_mode = #tpu.pipeline_mode<synchronous>, transform_indices = @transform_4, window_bounds = array<i64: 1, 256>}, {pipeline_mode = #tpu.pipeline_mode<synchronous>, transform_indices = @transform_5, window_bounds = array<i64: 256, 128>}, {pipeline_mode = #tpu.pipeline_mode<synchronous>, transform_indices = @transform_6, window_bounds = array<i64: 1, 128>}, {transform_indices = @transform_7, window_bounds = array<i64: 32, 128>}]} {
    %c0 = arith.constant 0 : index
    %c0_0 = arith.constant 0 : index
    %0 = vector.load %arg1[%c0, %c0_0] : memref<32x32xbf16, #tpu.memory_space<vmem>>, vector<32x32xbf16>
    %c0_1 = arith.constant 0 : index
    %c0_2 = arith.constant 0 : index
    %1 = vector.load %arg2[%c0_1, %c0_2] : memref<32x512xbf16, #tpu.memory_space<vmem>>, vector<32x512xbf16>
    %cst = arith.constant dense<0.000000e+00> : vector<32x512xf32>
    %2 = tpu.matmul %0, %1, %cst {dimension_numbers = #tpu.dot_dimension_numbers<[1], [0], [0], [1], [0, 0, 1, 1], [], []>} : vector<32x32xbf16>, vector<32x512xbf16>, vector<32x512xf32> -> vector<32x512xf32>
    %c0_3 = arith.constant 0 : index
    %c0_4 = arith.constant 0 : index
    %3 = vector.load %arg3[%c0_3, %c0_4] : memref<1x512xf32, #tpu.memory_space<vmem>>, vector<1x512xf32>
    %4 = vector.broadcast %3 : vector<1x512xf32> to vector<32x512xf32>
    %5 = arith.addf %2, %4 : vector<32x512xf32>
    %cst_5 = arith.constant 0.000000e+00 : f32
    %6 = vector.broadcast %cst_5 : f32 to vector<32x512xf32>
    %7 = arith.maximumf %5, %6 : vector<32x512xf32>
    %8 = arith.truncf %7 : vector<32x512xf32> to vector<32x512xbf16>
    %c0_6 = arith.constant 0 : index
    %c0_7 = arith.constant 0 : index
    %9 = vector.load %arg4[%c0_6, %c0_7] : memref<512x256xbf16, #tpu.memory_space<vmem>>, vector<512x256xbf16>
    %cst_8 = arith.constant dense<0.000000e+00> : vector<32x256xf32>
    %10 = tpu.matmul %8, %9, %cst_8 {dimension_numbers = #tpu.dot_dimension_numbers<[1], [0], [0], [1], [0, 0, 1, 1], [], []>} : vector<32x512xbf16>, vector<512x256xbf16>, vector<32x256xf32> -> vector<32x256xf32>
    %c0_9 = arith.constant 0 : index
    %c0_10 = arith.constant 0 : index
    %11 = vector.load %arg5[%c0_9, %c0_10] : memref<1x256xf32, #tpu.memory_space<vmem>>, vector<1x256xf32>
    %12 = vector.broadcast %11 : vector<1x256xf32> to vector<32x256xf32>
    %13 = arith.addf %10, %12 : vector<32x256xf32>
    %cst_11 = arith.constant 0.000000e+00 : f32
    %14 = vector.broadcast %cst_11 : f32 to vector<32x256xf32>
    %15 = arith.maximumf %13, %14 : vector<32x256xf32>
    %16 = arith.truncf %15 : vector<32x256xf32> to vector<32x256xbf16>
    %c0_12 = arith.constant 0 : index
    %c0_13 = arith.constant 0 : index
    %17 = vector.load %arg6[%c0_12, %c0_13] : memref<256x128xbf16, #tpu.memory_space<vmem>>, vector<256x128xbf16>
    %cst_14 = arith.constant dense<0.000000e+00> : vector<32x128xf32>
    %18 = tpu.matmul %16, %17, %cst_14 {dimension_numbers = #tpu.dot_dimension_numbers<[1], [0], [0], [1], [0, 0, 1, 1], [], []>} : vector<32x256xbf16>, vector<256x128xbf16>, vector<32x128xf32> -> vector<32x128xf32>
    %c0_15 = arith.constant 0 : index
    %c0_16 = arith.constant 0 : index
    %19 = vector.load %arg7[%c0_15, %c0_16] : memref<1x128xf32, #tpu.memory_space<vmem>>, vector<1x128xf32>
    %20 = vector.broadcast %19 : vector<1x128xf32> to vector<32x128xf32>
    %21 = arith.addf %18, %20 : vector<32x128xf32>
    %22 = arith.negf %21 : vector<32x128xf32>
    %23 = math.exp %22 : vector<32x128xf32>
    %cst_17 = arith.constant 1.000000e+00 : f32
    %24 = vector.broadcast %cst_17 : f32 to vector<32x128xf32>
    %25 = arith.addf %24, %23 : vector<32x128xf32>
    %26 = arith.divf %24, %25 : vector<32x128xf32>
    %c0_18 = arith.constant 0 : index
    %c0_19 = arith.constant 0 : index
    %27 = vector.load %arg8[%c0_18, %c0_19] : memref<32x128xf32, #tpu.memory_space<vmem>>, vector<32x128xf32>
    tpu.vector_store %arg8[%c0_18, %c0_19], %26 {strides = array<i32>} : memref<32x128xf32, #tpu.memory_space<vmem>>, vector<32x128xf32>,
    return
  }
  func.func @transform_0(%arg0: i32) -> (i32, i32) {
    %c0_i32 = arith.constant 0 : i32
    %c0_i32_0 = arith.constant 0 : i32
    return %arg0, %c0_i32 : i32, i32
  }
  func.func @transform_1(%arg0: i32) -> (i32, i32) {
    %c0_i32 = arith.constant 0 : i32
    %c0_i32_0 = arith.constant 0 : i32
    %c0_i32_1 = arith.constant 0 : i32
    return %c0_i32, %c0_i32_0 : i32, i32
  }
  func.func @transform_2(%arg0: i32) -> (i32, i32) {
    %c0_i32 = arith.constant 0 : i32
    %c0_i32_0 = arith.constant 0 : i32
    %c0_i32_1 = arith.constant 0 : i32
    return %c0_i32, %c0_i32_0 : i32, i32
  }
  func.func @transform_3(%arg0: i32) -> (i32, i32) {
    %c0_i32 = arith.constant 0 : i32
    %c0_i32_0 = arith.constant 0 : i32
    %c0_i32_1 = arith.constant 0 : i32
    return %c0_i32, %c0_i32_0 : i32, i32
  }
  func.func @transform_4(%arg0: i32) -> (i32, i32) {
    %c0_i32 = arith.constant 0 : i32
    %c0_i32_0 = arith.constant 0 : i32
    %c0_i32_1 = arith.constant 0 : i32
    return %c0_i32, %c0_i32_0 : i32, i32
  }
  func.func @transform_5(%arg0: i32) -> (i32, i32) {
    %c0_i32 = arith.constant 0 : i32
    %c0_i32_0 = arith.constant 0 : i32
    %c0_i32_1 = arith.constant 0 : i32
    return %c0_i32, %c0_i32_0 : i32, i32
  }
  func.func @transform_6(%arg0: i32) -> (i32, i32) {
    %c0_i32 = arith.constant 0 : i32
    %c0_i32_0 = arith.constant 0 : i32
    %c0_i32_1 = arith.constant 0 : i32
    return %c0_i32, %c0_i32_0 : i32, i32
  }
  func.func @transform_7(%arg0: i32) -> (i32, i32) {
    %c0_i32 = arith.constant 0 : i32
    %c0_i32_0 = arith.constant 0 : i32
    return %arg0, %c0_i32 : i32, i32
  }
}

</mosaic_0001>

<llo_original>
// kernel: tpu_custom_call.1
$region0: #{tpu_custom_call.1}
  #allocation0 [shape = 'u32[]', space=smem, size = 0x4, offset = 0x4, fixed_abs, tag = 'smem constant byte address 0x4 - core index']
  #allocation1 [shape = 'u32[144,128]{1,0:T(1,128)}', space=vmem, size = 0x12000, scoped, tag = 'internal scratch']
  %s0 = inlined_call_operand.vmem [shape: bf16[64,32], index: 0, kind: input, shape index: {}]
  %s1 = inlined_call_operand.hbm [shape: bf16[32,512], index: 1, kind: input, shape index: {}]
  %s2 = inlined_call_operand.vmem [shape: f32[1,512], index: 2, kind: input, shape index: {}]
  %s3 = inlined_call_operand.hbm [shape: bf16[512,256], index: 3, kind: input, shape index: {}]
  %s4 = inlined_call_operand.vmem [shape: f32[1,256], index: 4, kind: input, shape index: {}]
  %s5 = inlined_call_operand.hbm [shape: bf16[256,128], index: 5, kind: input, shape index: {}]
  %s6 = inlined_call_operand.vmem [shape: f32[1,128], index: 6, kind: input, shape index: {}]
  %s7 = inlined_call_operand.hbm [shape: f32[64,128], index: 7, kind: output, shape index: {}]
  %s8 = sld [smem:[#allocation0]]
  $region73: #{tpu_custom_call.1} parent=0
    _
  %s10 = ssub.s32 1, %s8
  %s11 = scalar_select 0, %s10, %s8
  $region1: #{tpu_custom_call.1} parent=0
    #allocation2 [shape = 'u8[32768]{0}', space=vmem, size = 0x8000, scoped, tag = 'input window, operand 1, single buffered']
    #allocation3 [shape = 's32[2]{0}', space=sflag, size = 0x8, scoped, tag = 'scoped memory for tpu_custom_call.1']
    #allocation4 [shape = 's32[2]{0}', space=sflag, size = 0x8, scoped, tag = 'scoped memory for tpu_custom_call.1']
    #allocation5 [shape = 'u8[262144]{0}', space=vmem, size = 0x40000, scoped, tag = 'input window, operand 3, single buffered']
    #allocation6 [shape = 's32[1]{0}', space=sflag, size = 0x4, scoped, tag = 'scoped memory for tpu_custom_call.1']
    #allocation7 [shape = 'u8[65536]{0}', space=vmem, size = 0x10000, scoped, tag = 'input window, operand 5, single buffered']
    #allocation8 [shape = 'u8[32768]{0}', space=vmem, size = 0x8000, scoped, tag = 'output window, operand 0']
    %12 = vsyncpa [#allocation3], 0
    %13 = vsyncpa [#allocation6], 0
    %14 = vsyncpa [#allocation4], 0
    %s15 = scalar_lea.sflag [#allocation4], 1
    %16 = vsyncpa %s15, 0
    loop: start=0, step=1, limit=4
    $region2: #{tpu_custom_call.1} parent=1 // loop_pre_header
      _
    $region3: #{tpu_custom_call.1} parent=1 // loop_header
      %s18 = sphi 0, %s22
      %p19 = scmp.ge.s32.totalorder %s18, 4
      %s28 = sphi 0, %s30
      %s31 = sphi 0, %s28
      %s32 = sphi 0, %s31
      %s48 = sphi 0, %s32
      %s52 = sphi 0, %s52
      %s54 = sphi 0, %s52
      %s55 = sphi 0, %s54
      %s69 = sphi 0, %s55
      %s73 = sphi 0, %s73
      %s75 = sphi 0, %s73
      %s76 = sphi 0, %s75
      %s90 = sphi 0, %s76
      %s94 = sphi 0, %s94
      %s96 = sphi 0, %s94
      %s97 = sphi 0, %s96
      %s111 = sphi 0, %s97
      %s115 = sphi 0, %s115
      %s117 = sphi 0, %s115
      %s118 = sphi 0, %s117
      %s132 = sphi 0, %s118
      %s136 = sphi 0, %s136
      %s138 = sphi 0, %s136
      %s139 = sphi 0, %s138
      %s153 = sphi 0, %s139
      %s157 = sphi 0, %s157
      %s159 = sphi 0, %s157
      %s160 = sphi 0, %s159
      %s174 = sphi 0, %s160
      %s180 = sphi 0, %s182
      %s183 = sphi 0, %s180
      %s184 = sphi 0, %s183
      %s200 = sphi 0, %s184
    $region4: #{tpu_custom_call.1} parent=1 // loop_header_branch
      %21 = sbr.rel (%p19) target = $region8
    $region5: #{tpu_custom_call.1} parent=1 // loop_body
      %s23 = ssub.s32 %s18, 1
      %s24 = ssub.s32 %s18, 2
      %s25 = sadd.s32 %s18, 1
      %s26 = ssub.s32 %s18, %s25
      %p27 = scmp.eq.s32.totalorder %s26, 0
      %s29 = sadd.s32 %s28, 1
      %s30 = scalar_select %p27, %s28, %s29
      %p33 = pneg %p27
      %p34 = scmp.eq.s32.totalorder %s18, 1
      %p35 = por %p33, %p34
      %p36 = scmp.ne.s32.totalorder %s28, %s31
      %p37 = scmp.eq.s32.totalorder %s18, 0
      %p38 = por %p36, %p37
      %p39 = scmp.ne.s32.totalorder %s28, %s31
      %p40 = scmp.eq.s32.totalorder %s23, 1
      %p41 = por %p39, %p40
      %p42 = scmp.ne.s32.totalorder %s31, %s32
      %p43 = scmp.eq.s32.totalorder %s23, 0
      %p44 = por %p42, %p43
      %p45 = scmp.ne.s32.totalorder %s31, %s32
      %p46 = scmp.eq.s32.totalorder %s24, 1
      %p47 = por %p45, %p46
      %p49 = scmp.ne.s32.totalorder %s32, %s48
      %p50 = scmp.eq.s32.totalorder %s24, 0
      %p51 = por %p49, %p50
      %s53 = sadd.s32 %s52, 1
      %p56 = scmp.eq.s32.totalorder %s18, 1
      %p57 = scmp.ne.s32.totalorder %s52, %s54
      %p58 = scmp.eq.s32.totalorder %s18, 0
      %p59 = por %p57, %p58
      %p60 = scmp.ne.s32.totalorder %s52, %s54
      %p61 = scmp.eq.s32.totalorder %s23, 1
      %p62 = por %p60, %p61
      %p63 = scmp.ne.s32.totalorder %s54, %s55
      %p64 = scmp.eq.s32.totalorder %s23, 0
      %p65 = por %p63, %p64
      %p66 = scmp.ne.s32.totalorder %s54, %s55
      %p67 = scmp.eq.s32.totalorder %s24, 1
      %p68 = por %p66, %p67
      %p70 = scmp.ne.s32.totalorder %s55, %s69
      %p71 = scmp.eq.s32.totalorder %s24, 0
      %p72 = por %p70, %p71
      %s74 = sadd.s32 %s73, 1
      %p77 = scmp.eq.s32.totalorder %s18, 1
      %p78 = scmp.ne.s32.totalorder %s73, %s75
      %p79 = scmp.eq.s32.totalorder %s18, 0
      %p80 = por %p78, %p79
      %p81 = scmp.ne.s32.totalorder %s73, %s75
      %p82 = scmp.eq.s32.totalorder %s23, 1
      %p83 = por %p81, %p82
      %p84 = scmp.ne.s32.totalorder %s75, %s76
      %p85 = scmp.eq.s32.totalorder %s23, 0
      %p86 = por %p84, %p85
      %p87 = scmp.ne.s32.totalorder %s75, %s76
      %p88 = scmp.eq.s32.totalorder %s24, 1
      %p89 = por %p87, %p88
      %p91 = scmp.ne.s32.totalorder %s76, %s90
      %p92 = scmp.eq.s32.totalorder %s24, 0
      %p93 = por %p91, %p92
      %s95 = sadd.s32 %s94, 1
      %p98 = scmp.eq.s32.totalorder %s18, 1
      %p99 = scmp.ne.s32.totalorder %s94, %s96
      %p100 = scmp.eq.s32.totalorder %s18, 0
      %p101 = por %p99, %p100
      %p102 = scmp.ne.s32.totalorder %s94, %s96
      %p103 = scmp.eq.s32.totalorder %s23, 1
      %p104 = por %p102, %p103
      %p105 = scmp.ne.s32.totalorder %s96, %s97
      %p106 = scmp.eq.s32.totalorder %s23, 0
      %p107 = por %p105, %p106
      %p108 = scmp.ne.s32.totalorder %s96, %s97
      %p109 = scmp.eq.s32.totalorder %s24, 1
      %p110 = por %p108, %p109
      %p112 = scmp.ne.s32.totalorder %s97, %s111
      %p113 = scmp.eq.s32.totalorder %s24, 0
      %p114 = por %p112, %p113
      %s116 = sadd.s32 %s115, 1
      %p119 = scmp.eq.s32.totalorder %s18, 1
      %p120 = scmp.ne.s32.totalorder %s115, %s117
      %p121 = scmp.eq.s32.totalorder %s18, 0
      %p122 = por %p120, %p121
      %p123 = scmp.ne.s32.totalorder %s115, %s117
      %p124 = scmp.eq.s32.totalorder %s23, 1
      %p125 = por %p123, %p124
      %p126 = scmp.ne.s32.totalorder %s117, %s118
      %p127 = scmp.eq.s32.totalorder %s23, 0
      %p128 = por %p126, %p127
      %p129 = scmp.ne.s32.totalorder %s117, %s118
      %p130 = scmp.eq.s32.totalorder %s24, 1
      %p131 = por %p129, %p130
      %p133 = scmp.ne.s32.totalorder %s118, %s132
      %p134 = scmp.eq.s32.totalorder %s24, 0
      %p135 = por %p133, %p134
      %s137 = sadd.s32 %s136, 1
      %p140 = scmp.eq.s32.totalorder %s18, 1
      %p141 = scmp.ne.s32.totalorder %s136, %s138
      %p142 = scmp.eq.s32.totalorder %s18, 0
      %p143 = por %p141, %p142
      %p144 = scmp.ne.s32.totalorder %s136, %s138
      %p145 = scmp.eq.s32.totalorder %s23, 1
      %p146 = por %p144, %p145
      %p147 = scmp.ne.s32.totalorder %s138, %s139
      %p148 = scmp.eq.s32.totalorder %s23, 0
      %p149 = por %p147, %p148
      %p150 = scmp.ne.s32.totalorder %s138, %s139
      %p151 = scmp.eq.s32.totalorder %s24, 1
      %p152 = por %p150, %p151
      %p154 = scmp.ne.s32.totalorder %s139, %s153
      %p155 = scmp.eq.s32.totalorder %s24, 0
      %p156 = por %p154, %p155
      %s158 = sadd.s32 %s157, 1
      %p161 = scmp.eq.s32.totalorder %s18, 1
      %p162 = scmp.ne.s32.totalorder %s157, %s159
      %p163 = scmp.eq.s32.totalorder %s18, 0
      %p164 = por %p162, %p163
      %p165 = scmp.ne.s32.totalorder %s157, %s159
      %p166 = scmp.eq.s32.totalorder %s23, 1
      %p167 = por %p165, %p166
      %p168 = scmp.ne.s32.totalorder %s159, %s160
      %p169 = scmp.eq.s32.totalorder %s23, 0
      %p170 = por %p168, %p169
      %p171 = scmp.ne.s32.totalorder %s159, %s160
      %p172 = scmp.eq.s32.totalorder %s24, 1
      %p173 = por %p171, %p172
      %p175 = scmp.ne.s32.totalorder %s160, %s174
      %p176 = scmp.eq.s32.totalorder %s24, 0
      %p177 = por %p175, %p176
      %s178 = ssub.s32 %s18, %s25
      %p179 = scmp.eq.s32.totalorder %s178, 0
      %s181 = sadd.s32 %s180, 1
      %s182 = scalar_select %p179, %s180, %s181
      %p185 = pneg %p179
      %p186 = scmp.eq.s32.totalorder %s18, 1
      %p187 = por %p185, %p186
      %p188 = scmp.ne.s32.totalorder %s180, %s183
      %p189 = scmp.eq.s32.totalorder %s18, 0
      %p190 = por %p188, %p189
      %p191 = scmp.ne.s32.totalorder %s180, %s183
      %p192 = scmp.eq.s32.totalorder %s23, 1
      %p193 = por %p191, %p192
      %p194 = scmp.ne.s32.totalorder %s183, %s184
      %p195 = scmp.eq.s32.totalorder %s23, 0
      %p196 = por %p194, %p195
      %p197 = scmp.ne.s32.totalorder %s183, %s184
      %p198 = scmp.eq.s32.totalorder %s24, 1
      %p199 = por %p197, %p198
      %p201 = scmp.ne.s32.totalorder %s184, %s200
      %p202 = scmp.eq.s32.totalorder %s24, 0
      %p203 = por %p201, %p202
      %p204 = scmp.le.s32.totalorder 1, %s18
      %p205 = scmp.lt.s32.totalorder %s18, 3
      %p206 = pnand %p204, %p205
      %p207 = pneg %p206
      // Predicated region
      $region9: #{tpu_custom_call.1} parent=5 // pred_check
        _
      $region10: #{tpu_custom_call.1} parent=5 // pred_check_branch
        %209 = sbr.rel (%p206) target = $region12
      $region11: #{tpu_custom_call.1} parent=5 // pred_region
        %s210 = ssub.s32 %s18, 1
        // Predicated region
        $region13: #{tpu_custom_call.1} parent=11 // pred_check
          %p211 = pneg %p65
        $region14: #{tpu_custom_call.1} parent=11 // pred_check_branch
          %213 = sbr.rel (%p211) target = $region16
        $region15: #{tpu_custom_call.1} parent=11 // pred_region
          %s215 = ssub.s32 1024, 1024
          %216 = vsyncadd [#allocation3], %s215
          %s217 = sshll.u32 [#allocation2], 4
          %s218 = int_to_ptr.vmem [resolvable:$true] %s217
          %223 = dma.hbm_to_vmem [thread:$0]  %s1, 1024, %s218, [#allocation3], 256, 256, 16
        $region16: #{tpu_custom_call.1} parent=11 // pred_fallthru
          _
        // Predicated region
        $region17: #{tpu_custom_call.1} parent=11 // pred_check
          %p224 = pneg %p86
        $region18: #{tpu_custom_call.1} parent=11 // pred_check_branch
          %226 = sbr.rel (%p224) target = $region20
        $region19: #{tpu_custom_call.1} parent=11 // pred_region
          _
        $region20: #{tpu_custom_call.1} parent=11 // pred_fallthru
          _
        // Predicated region
        $region21: #{tpu_custom_call.1} parent=11 // pred_check
          %p227 = pneg %p107
        $region22: #{tpu_custom_call.1} parent=11 // pred_check_branch
          %229 = sbr.rel (%p227) target = $region24
        $region23: #{tpu_custom_call.1} parent=11 // pred_region
          %s231 = ssub.s32 8192, 8192
          %232 = vsyncadd [#allocation6], %s231
          %s233 = sshll.u32 [#allocation5], 4
          %s234 = int_to_ptr.vmem [resolvable:$true] %s233
          %239 = dma.hbm_to_vmem [thread:$0]  %s3, 8192, %s234, [#allocation6], 128, 128, 8
        $region24: #{tpu_custom_call.1} parent=11 // pred_fallthru
          _
        // Predicated region
        $region25: #{tpu_custom_call.1} parent=11 // pred_check
          %p240 = pneg %p128
        $region26: #{tpu_custom_call.1} parent=11 // pred_check_branch
          %242 = sbr.rel (%p240) target = $region28
        $region27: #{tpu_custom_call.1} parent=11 // pred_region
          _
        $region28: #{tpu_custom_call.1} parent=11 // pred_fallthru
          _
        // Predicated region
        $region29: #{tpu_custom_call.1} parent=11 // pred_check
          %p243 = pneg %p149
        $region30: #{tpu_custom_call.1} parent=11 // pred_check_branch
          %245 = sbr.rel (%p243) target = $region32
        $region31: #{tpu_custom_call.1} parent=11 // pred_region
          %s247 = ssub.s32 2048, 2048
          %248 = vsyncadd [#allocation6], %s247
          %s249 = sshll.u32 [#allocation7], 4
          %s250 = int_to_ptr.vmem [resolvable:$true] %s249
          %255 = dma.hbm_to_vmem [thread:$0]  %s5, 2048, %s250, [#allocation6], 64, 64, 4
        $region32: #{tpu_custom_call.1} parent=11 // pred_fallthru
          _
        // Predicated region
        $region33: #{tpu_custom_call.1} parent=11 // pred_check
          %p256 = pneg %p170
        $region34: #{tpu_custom_call.1} parent=11 // pred_check_branch
          %258 = sbr.rel (%p256) target = $region36
        $region35: #{tpu_custom_call.1} parent=11 // pred_region
          _
        $region36: #{tpu_custom_call.1} parent=11 // pred_fallthru
          _
      $region12: #{tpu_custom_call.1} parent=5 // pred_fallthru
        _
      %p259 = scmp.lt.s32.totalorder %s18, 2
      // Predicated region
      $region37: #{tpu_custom_call.1} parent=5 // pred_check
        %p260 = pneg %p259
      $region38: #{tpu_custom_call.1} parent=5 // pred_check_branch
        %262 = sbr.rel (%p260) target = $region40
      $region39: #{tpu_custom_call.1} parent=5 // pred_region
        // Predicated region
        $region41: #{tpu_custom_call.1} parent=39 // pred_check
          %p263 = pneg %p38
        $region42: #{tpu_custom_call.1} parent=39 // pred_check_branch
          %265 = sbr.rel (%p263) target = $region44
        $region43: #{tpu_custom_call.1} parent=39 // pred_region
          %s266 = smul.u32 4, %s18
          %p267 = scmp.lt.s32.totalorder %s266, 7
          %s268 = scalar_select %p267, %s266, 7
          %s269 = smul.addr %s268, 4
          %s270 = scalar_lea.vmem %s0, %s269
          %s271 = smul.u32 4, %s18
        $region44: #{tpu_custom_call.1} parent=39 // pred_fallthru
          _
      $region40: #{tpu_custom_call.1} parent=5 // pred_fallthru
        _
      %p272 = scmp.le.s32.totalorder 1, %s18
      %p273 = scmp.lt.s32.totalorder %s18, 3
      %p274 = pnand %p272, %p273
      %p275 = pneg %p274
      // Predicated region
      $region45: #{tpu_custom_call.1} parent=5 // pred_check
        _
      $region46: #{tpu_custom_call.1} parent=5 // pred_check_branch
        %277 = sbr.rel (%p274) target = $region48
      $region47: #{tpu_custom_call.1} parent=5 // pred_region
        %s278 = ssub.s32 %s18, 1
        // Predicated region
        $region49: #{tpu_custom_call.1} parent=47 // pred_check
          %p279 = pneg %p65
        $region50: #{tpu_custom_call.1} parent=47 // pred_check_branch
          %281 = sbr.rel (%p279) target = $region52
        $region51: #{tpu_custom_call.1} parent=47 // pred_region
          %282 = dma.done [#allocation3], 1024
        $region52: #{tpu_custom_call.1} parent=47 // pred_fallthru
          _
        // Predicated region
        $region53: #{tpu_custom_call.1} parent=47 // pred_check
          %p283 = pneg %p107
        $region54: #{tpu_custom_call.1} parent=47 // pred_check_branch
          %285 = sbr.rel (%p283) target = $region56
        $region55: #{tpu_custom_call.1} parent=47 // pred_region
          %286 = dma.done [#allocation6], 8192
        $region56: #{tpu_custom_call.1} parent=47 // pred_fallthru
          _
        // Predicated region
        $region57: #{tpu_custom_call.1} parent=47 // pred_check
          %p287 = pneg %p149
        $region58: #{tpu_custom_call.1} parent=47 // pred_check_branch
          %289 = sbr.rel (%p287) target = $region60
        $region59: #{tpu_custom_call.1} parent=47 // pred_region
          %290 = dma.done [#allocation6], 2048
        $region60: #{tpu_custom_call.1} parent=47 // pred_fallthru
          _
        %s291 = smul.u32 4, %s23
        %p292 = scmp.lt.s32.totalorder %s291, 7
        %s293 = scalar_select %p292, %s291, 7
        %s294 = smul.addr %s293, 4
        %s295 = scalar_lea.vmem %s0, %s294
        %p296 = pneg %p44
        %p297 = pneg %p41
        %p298 = pneg %p65
        %p299 = pneg %p62
        %p300 = pneg %p86
        %p301 = pneg %p83
        %p302 = pneg %p107
        %p303 = pneg %p104
        %p304 = pneg %p128
        %p305 = pneg %p125
        %p306 = pneg %p149
        %p307 = pneg %p146
        %p308 = pneg %p170
        %p309 = pneg %p167
        %p310 = pneg %p196
        %p311 = pneg %p193
        %s312 = sand.u32 %s183, 1
        %s313 = scalar_lea.sflag [#allocation4], %s312
        %s314 = sand.u32 %s183, 1
        %s315 = smul.addr %s314, 32
        %s316 = scalar_lea.vmem [#allocation8], %s315
        %s317 = smul.u32 4, %s23
        %p318 = scmp.lt.s32.totalorder %s317, 7
        %s319 = scalar_select %p318, %s317, 7
        %s320 = smul.addr %s319, 4
        %s321 = scalar_lea.vmem %s0, %s320
        %s322 = smul.u32 4, %s23
        %s323 = smul.u32 4, %s23
        %v325 = vld [vmem:[%s321] sm:$0xf]
        %v326 = vld [vmem:[%s321 + $0x4] sm:$0xf]
        %v327 = vld [vmem:[%s321 + $0x8] sm:$0xf]
        %v328 = vld [vmem:[%s321 + $0xc] sm:$0xf]
        %v329 = vld [vmem:[#allocation2] sm:$0xff]
        %v330 = vld [vmem:[#allocation2 + $0x8] sm:$0xff]
        %v331 = vld [vmem:[#allocation2 + $0x10] sm:$0xff]
        %v332 = vld [vmem:[#allocation2 + $0x18] sm:$0xff]
        %v333 = vld [vmem:[#allocation2 + $0x20] sm:$0xff]
        %v334 = vld [vmem:[#allocation2 + $0x28] sm:$0xff]
        %v335 = vld [vmem:[#allocation2 + $0x30] sm:$0xff]
        %v336 = vld [vmem:[#allocation2 + $0x38] sm:$0xff]
        %v337 = vld [vmem:[%s2] sm:$0xf]
        %v339 = vlaneseq
        %v340 = vshrl.u32 %v339, 7
        %v341 = vsub.s32 0, %v340
        %v342 = vrot.slane %v337, %v341
        %v343 = vlaneseq
        %v344 = vshrl.u32 %v343, 7
        %v345 = vsub.s32 1, %v344
        %v346 = vrot.slane %v337, %v345
        %v347 = vlaneseq
        %v348 = vshrl.u32 %v347, 7
        %v349 = vsub.s32 2, %v348
        %v350 = vrot.slane %v337, %v349
        %v351 = vlaneseq
        %v352 = vshrl.u32 %v351, 7
        %v353 = vsub.s32 3, %v352
        %v354 = vrot.slane %v337, %v353
        %v363 = vunpack.c.l.b16 %v325
        %v364 = vunpack.c.l.b16 %v326
        %v365 = vunpack.c.l.b16 %v327
        %v366 = vunpack.c.l.b16 %v328
        %v367 = vpack.c.b16 %v364, %v363
        %v368 = vpack.c.b16 %v366, %v365
        %v377 = vunpack.c.l.b16 %v329
        %v378 = vunpack.c.h.b16 %v329
        %v379 = vunpack.c.l.b16 %v330
        %v380 = vunpack.c.h.b16 %v330
        %v381 = vunpack.c.l.b16 %v331
        %v382 = vunpack.c.h.b16 %v331
        %v383 = vunpack.c.l.b16 %v332
        %v384 = vunpack.c.h.b16 %v332
        %v385 = vunpack.c.l.b16 %v333
        %v386 = vunpack.c.h.b16 %v333
        %v387 = vunpack.c.l.b16 %v334
        %v388 = vunpack.c.h.b16 %v334
        %v389 = vunpack.c.l.b16 %v335
        %v390 = vunpack.c.h.b16 %v335
        %v391 = vunpack.c.l.b16 %v336
        %v392 = vunpack.c.h.b16 %v336
        %v393 = vpack.c.b16 %v381, %v377
        %v394 = vpack.c.b16 %v382, %v378
        %v395 = vpack.c.b16 %v383, %v379
        %v396 = vpack.c.b16 %v384, %v380
        %v397 = vpack.c.b16 %v389, %v385
        %v398 = vpack.c.b16 %v390, %v386
        %v399 = vpack.c.b16 %v391, %v387
        %v400 = vpack.c.b16 %v392, %v388
        %vm409 = vcmask 261120
        %v411 = vsel %vm409, %v367, 0
        %v414 = vsel %vm409, %v368, 0
        %416 = vmatprep.subr.bf16.mxu0 %v394
        %417 = vmatpush1.bf16.msra.mxu0 %v393
        %418 = vmatprep.subr.bf16.mxu0 %v398
        %419 = vmatpush1.bf16.msra.mxu0 %v397
        %420 = vmatprep.subr.bf16.mxu0 0
        %421 = vmatpush1.bf16.msra.mxu0 0
        %422 = vmatprep.subr.bf16.mxu0 0
        %423 = vmatpush1.bf16.msra.mxu0 0
        %424 = vmatprep.subr.bf16.mxu0 0
        %425 = vmatpush1.bf16.msra.mxu0 0
        %426 = vmatprep.subr.bf16.mxu0 0
        %427 = vmatpush1.bf16.msra.mxu0 0
        %428 = vmatprep.subr.bf16.mxu0 0
        %429 = vmatpush1.bf16.msra.mxu0 0
        %430 = vmatprep.subr.bf16.mxu0 0
        %431 = vmatpush1.bf16.msra.mxu0 0
        %432 = vmatprep.subr.bf16.mxu0 0
        %433 = vmatpush1.bf16.msra.mxu0 0
        %434 = vmatprep.subr.bf16.mxu0 0
        %435 = vmatpush1.bf16.msra.mxu0 0
        %436 = vmatprep.subr.bf16.mxu0 0
        %437 = vmatpush1.bf16.msra.mxu0 0
        %438 = vmatprep.subr.bf16.mxu0 0
        %439 = vmatpush1.bf16.msra.mxu0 0
        %440 = vmatprep.subr.bf16.mxu0 0
        %441 = vmatpush1.bf16.msra.mxu0 0
        %442 = vmatprep.subr.bf16.mxu0 0
        %443 = vmatpush1.bf16.msra.mxu0 0
        %444 = vmatprep.subr.bf16.mxu0 0
        %445 = vmatpush1.bf16.msra.mxu0 0
        %446 = vmatprep.subr.bf16.mxu0 0
        %447 = vmatpush1.bf16.msra.mxu0 0
        %448 = vmatprep.mubr.bf16.mxu0 0
        %449 = vmatmul.mubr.bf16.gmra.mrb[0].mxu0 %v411
        %v450 = vpop.f32.mrb[0].mxu0
        %v451 = vadd.f32 %v342, %v450
        %v452 = vpop.f32.mrb[0].mxu0
        %v453 = vadd.f32 %v346, %v452
        %v454 = vpop.f32.mrb[0].mxu0
        %v455 = vadd.f32 %v342, %v454
        %v456 = vpop.f32.mrb[0].mxu0
        %v457 = vadd.f32 %v346, %v456
        %458 = vmatprep.mubr.bf16.mxu0 0
        %459 = vmatmul.mubr.bf16.gmra.mrb[0].mxu0 %v414
        %v460 = vpop.f32.mrb[0].mxu0
        %v461 = vadd.f32 %v342, %v460
        %v462 = vpop.f32.mrb[0].mxu0
        %v463 = vadd.f32 %v346, %v462
        %v464 = vpop.f32.mrb[0].mxu0
        %v465 = vadd.f32 %v342, %v464
        %v466 = vpop.f32.mrb[0].mxu0
        %v467 = vadd.f32 %v346, %v466
        %468 = vdwg.mxu0
        %469 = vmatprep.subr.bf16.mxu0 %v396
        %470 = vmatpush1.bf16.msra.mxu0 %v395
        %471 = vmatprep.subr.bf16.mxu0 %v400
        %472 = vmatpush1.bf16.msra.mxu0 %v399
        %473 = vmatprep.subr.bf16.mxu0 0
        %474 = vmatpush1.bf16.msra.mxu0 0
        %475 = vmatprep.subr.bf16.mxu0 0
        %476 = vmatpush1.bf16.msra.mxu0 0
        %477 = vmatprep.subr.bf16.mxu0 0
        %478 = vmatpush1.bf16.msra.mxu0 0
        %479 = vmatprep.subr.bf16.mxu0 0
        %480 = vmatpush1.bf16.msra.mxu0 0
        %481 = vmatprep.subr.bf16.mxu0 0
        %482 = vmatpush1.bf16.msra.mxu0 0
        %483 = vmatprep.subr.bf16.mxu0 0
        %484 = vmatpush1.bf16.msra.mxu0 0
        %485 = vmatprep.subr.bf16.mxu0 0
        %486 = vmatpush1.bf16.msra.mxu0 0
        %487 = vmatprep.subr.bf16.mxu0 0
        %488 = vmatpush1.bf16.msra.mxu0 0
        %489 = vmatprep.subr.bf16.mxu0 0
        %490 = vmatpush1.bf16.msra.mxu0 0
        %491 = vmatprep.subr.bf16.mxu0 0
        %492 = vmatpush1.bf16.msra.mxu0 0
        %493 = vmatprep.subr.bf16.mxu0 0
        %494 = vmatpush1.bf16.msra.mxu0 0
        %495 = vmatprep.subr.bf16.mxu0 0
        %496 = vmatpush1.bf16.msra.mxu0 0
        %497 = vmatprep.subr.bf16.mxu0 0
        %498 = vmatpush1.bf16.msra.mxu0 0
        %499 = vmatprep.subr.bf16.mxu0 0
        %500 = vmatpush1.bf16.msra.mxu0 0
        %501 = vmatprep.mubr.bf16.mxu0 0
        %502 = vmatmul.mubr.bf16.gmra.mrb[0].mxu0 %v411
        %v503 = vpop.f32.mrb[0].mxu0
        %v504 = vadd.f32 %v350, %v503
        %v505 = vpop.f32.mrb[0].mxu0
        %v506 = vadd.f32 %v354, %v505
        %v507 = vpop.f32.mrb[0].mxu0
        %v508 = vadd.f32 %v350, %v507
        %v509 = vpop.f32.mrb[0].mxu0
        %v510 = vadd.f32 %v354, %v509
        %511 = vmatprep.mubr.bf16.mxu0 0
        %512 = vmatmul.mubr.bf16.gmra.mrb[0].mxu0 %v414
        %v513 = vpop.f32.mrb[0].mxu0
        %v514 = vadd.f32 %v350, %v513
        %v515 = vpop.f32.mrb[0].mxu0
        %v516 = vadd.f32 %v354, %v515
        %v517 = vpop.f32.mrb[0].mxu0
        %v518 = vadd.f32 %v350, %v517
        %v519 = vpop.f32.mrb[0].mxu0
        %v520 = vadd.f32 %v354, %v519
        %521 = vdwg.mxu0
        %v522 = vmax.f32 %v451, 0.0
        %v523 = vmax.f32 %v453, 0.0
        %v524 = vmax.f32 %v504, 0.0
        %v525 = vmax.f32 %v506, 0.0
        %v526 = vmax.f32 %v455, 0.0
        %v527 = vmax.f32 %v457, 0.0
        %v528 = vmax.f32 %v508, 0.0
        %v529 = vmax.f32 %v510, 0.0
        %v530 = vmax.f32 %v461, 0.0
        %v531 = vmax.f32 %v463, 0.0
        %v532 = vmax.f32 %v514, 0.0
        %v533 = vmax.f32 %v516, 0.0
        %v534 = vmax.f32 %v465, 0.0
        %v535 = vmax.f32 %v467, 0.0
        %v536 = vmax.f32 %v518, 0.0
        %v537 = vmax.f32 %v520, 0.0
        %v538 = vpack.c.bf16 %v526, %v522
        %v539 = vpack.c.bf16 %v527, %v523
        %v540 = vpack.c.bf16 %v528, %v524
        %v541 = vpack.c.bf16 %v529, %v525
        %v542 = vpack.c.bf16 %v534, %v530
        %v543 = vpack.c.bf16 %v535, %v531
        %v544 = vpack.c.bf16 %v536, %v532
        %v545 = vpack.c.bf16 %v537, %v533
        %v546 = vld [vmem:[#allocation5] sm:$0xff]
        %v547 = vld [vmem:[#allocation5 + $0x8] sm:$0xff]
        %v548 = vld [vmem:[#allocation5 + $0x10] sm:$0xff]
        %v549 = vld [vmem:[#allocation5 + $0x18] sm:$0xff]
        %v550 = vld [vmem:[#allocation5 + $0x20] sm:$0xff]
        %v551 = vld [vmem:[#allocation5 + $0x28] sm:$0xff]
        %v552 = vld [vmem:[#allocation5 + $0x30] sm:$0xff]
        %v553 = vld [vmem:[#allocation5 + $0x38] sm:$0xff]
        %v554 = vld [vmem:[#allocation5 + $0x40] sm:$0xff]
        %v555 = vld [vmem:[#allocation5 + $0x48] sm:$0xff]
        %v556 = vld [vmem:[#allocation5 + $0x50] sm:$0xff]
        %v557 = vld [vmem:[#allocation5 + $0x58] sm:$0xff]
        %v558 = vld [vmem:[#allocation5 + $0x60] sm:$0xff]
        %v559 = vld [vmem:[#allocation5 + $0x68] sm:$0xff]
        %v560 = vld [vmem:[#allocation5 + $0x70] sm:$0xff]
        %v561 = vld [vmem:[#allocation5 + $0x78] sm:$0xff]
        %v562 = vld [vmem:[#allocation5 + $0x80] sm:$0xff]
        %v563 = vld [vmem:[#allocation5 + $0x88] sm:$0xff]
        %v564 = vld [vmem:[#allocation5 + $0x90] sm:$0xff]
        %v565 = vld [vmem:[#allocation5 + $0x98] sm:$0xff]
        %v566 = vld [vmem:[#allocation5 + $0xa0] sm:$0xff]
        %v567 = vld [vmem:[#allocation5 + $0xa8] sm:$0xff]
        %v568 = vld [vmem:[#allocation5 + $0xb0] sm:$0xff]
        %v569 = vld [vmem:[#allocation5 + $0xb8] sm:$0xff]
        %v570 = vld [vmem:[#allocation5 + $0xc0] sm:$0xff]
        %v571 = vld [vmem:[#allocation5 + $0xc8] sm:$0xff]
        %v572 = vld [vmem:[#allocation5 + $0xd0] sm:$0xff]
        %v573 = vld [vmem:[#allocation5 + $0xd8] sm:$0xff]
        %v574 = vld [vmem:[#allocation5 + $0xe0] sm:$0xff]
        %v575 = vld [vmem:[#allocation5 + $0xe8] sm:$0xff]
        %v576 = vld [vmem:[#allocation5 + $0xf0] sm:$0xff]
        %v577 = vld [vmem:[#allocation5 + $0xf8] sm:$0xff]
        %v578 = vld [vmem:[#allocation5 + $0x100] sm:$0xff]
        %v579 = vld [vmem:[#allocation5 + $0x108] sm:$0xff]
        %v580 = vld [vmem:[#allocation5 + $0x110] sm:$0xff]
        %v581 = vld [vmem:[#allocation5 + $0x118] sm:$0xff]
        %v582 = vld [vmem:[#allocation5 + $0x120] sm:$0xff]
        %v583 = vld [vmem:[#allocation5 + $0x128] sm:$0xff]
        %v584 = vld [vmem:[#allocation5 + $0x130] sm:$0xff]
        %v585 = vld [vmem:[#allocation5 + $0x138] sm:$0xff]
        %v586 = vld [vmem:[#allocation5 + $0x140] sm:$0xff]
        %v587 = vld [vmem:[#allocation5 + $0x148] sm:$0xff]
        %v588 = vld [vmem:[#allocation5 + $0x150] sm:$0xff]
        %v589 = vld [vmem:[#allocation5 + $0x158] sm:$0xff]
        %v590 = vld [vmem:[#allocation5 + $0x160] sm:$0xff]
        %v591 = vld [vmem:[#allocation5 + $0x168] sm:$0xff]
        %v592 = vld [vmem:[#allocation5 + $0x170] sm:$0xff]
        %v593 = vld [vmem:[#allocation5 + $0x178] sm:$0xff]
        %v594 = vld [vmem:[#allocation5 + $0x180] sm:$0xff]
        %v595 = vld [vmem:[#allocation5 + $0x188] sm:$0xff]
        %v596 = vld [vmem:[#allocation5 + $0x190] sm:$0xff]
        %v597 = vld [vmem:[#allocation5 + $0x198] sm:$0xff]
        %v598 = vld [vmem:[#allocation5 + $0x1a0] sm:$0xff]
        %v599 = vld [vmem:[#allocation5 + $0x1a8] sm:$0xff]
        %v600 = vld [vmem:[#allocation5 + $0x1b0] sm:$0xff]
        %v601 = vld [vmem:[#allocation5 + $0x1b8] sm:$0xff]
        %v602 = vld [vmem:[#allocation5 + $0x1c0] sm:$0xff]
        %v603 = vld [vmem:[#allocation5 + $0x1c8] sm:$0xff]
        %v604 = vld [vmem:[#allocation5 + $0x1d0] sm:$0xff]
        %v605 = vld [vmem:[#allocation5 + $0x1d8] sm:$0xff]
        %v606 = vld [vmem:[#allocation5 + $0x1e0] sm:$0xff]
        %v607 = vld [vmem:[#allocation5 + $0x1e8] sm:$0xff]
        %v608 = vld [vmem:[#allocation5 + $0x1f0] sm:$0xff]
        %v609 = vld [vmem:[#allocation5 + $0x1f8] sm:$0xff]
        %v610 = vld [vmem:[%s4] sm:$0x3]
        %v612 = vlaneseq
        %v613 = vshrl.u32 %v612, 7
        %v614 = vsub.s32 0, %v613
        %v615 = vrot.slane %v610, %v614
        %v616 = vlaneseq
        %v617 = vshrl.u32 %v616, 7
        %v618 = vsub.s32 1, %v617
        %v619 = vrot.slane %v610, %v618
        %v686 = vunpack.c.l.b16 %v546
        %v687 = vunpack.c.h.b16 %v546
        %v688 = vunpack.c.l.b16 %v547
        %v689 = vunpack.c.h.b16 %v547
        %v690 = vunpack.c.l.b16 %v548
        %v691 = vunpack.c.h.b16 %v548
        %v692 = vunpack.c.l.b16 %v549
        %v693 = vunpack.c.h.b16 %v549
        %v694 = vunpack.c.l.b16 %v550
        %v695 = vunpack.c.h.b16 %v550
        %v696 = vunpack.c.l.b16 %v551
        %v697 = vunpack.c.h.b16 %v551
        %v698 = vunpack.c.l.b16 %v552
        %v699 = vunpack.c.h.b16 %v552
        %v700 = vunpack.c.l.b16 %v553
        %v701 = vunpack.c.h.b16 %v553
        %v702 = vunpack.c.l.b16 %v554
        %v703 = vunpack.c.h.b16 %v554
        %v704 = vunpack.c.l.b16 %v555
        %v705 = vunpack.c.h.b16 %v555
        %v706 = vunpack.c.l.b16 %v556
        %v707 = vunpack.c.h.b16 %v556
        %v708 = vunpack.c.l.b16 %v557
        %v709 = vunpack.c.h.b16 %v557
        %v710 = vunpack.c.l.b16 %v558
        %v711 = vunpack.c.h.b16 %v558
        %v712 = vunpack.c.l.b16 %v559
        %v713 = vunpack.c.h.b16 %v559
        %v714 = vunpack.c.l.b16 %v560
        %v715 = vunpack.c.h.b16 %v560
        %v716 = vunpack.c.l.b16 %v561
        %v717 = vunpack.c.h.b16 %v561
        %v718 = vunpack.c.l.b16 %v562
        %v719 = vunpack.c.h.b16 %v562
        %v720 = vunpack.c.l.b16 %v563
        %v721 = vunpack.c.h.b16 %v563
        %v722 = vunpack.c.l.b16 %v564
        %v723 = vunpack.c.h.b16 %v564
        %v724 = vunpack.c.l.b16 %v565
        %v725 = vunpack.c.h.b16 %v565
        %v726 = vunpack.c.l.b16 %v566
        %v727 = vunpack.c.h.b16 %v566
        %v728 = vunpack.c.l.b16 %v567
        %v729 = vunpack.c.h.b16 %v567
        %v730 = vunpack.c.l.b16 %v568
        %v731 = vunpack.c.h.b16 %v568
        %v732 = vunpack.c.l.b16 %v569
        %v733 = vunpack.c.h.b16 %v569
        %v734 = vunpack.c.l.b16 %v570
        %v735 = vunpack.c.h.b16 %v570
        %v736 = vunpack.c.l.b16 %v571
        %v737 = vunpack.c.h.b16 %v571
        %v738 = vunpack.c.l.b16 %v572
        %v739 = vunpack.c.h.b16 %v572
        %v740 = vunpack.c.l.b16 %v573
        %v741 = vunpack.c.h.b16 %v573
        %v742 = vunpack.c.l.b16 %v574
        %v743 = vunpack.c.h.b16 %v574
        %v744 = vunpack.c.l.b16 %v575
        %v745 = vunpack.c.h.b16 %v575
        %v746 = vunpack.c.l.b16 %v576
        %v747 = vunpack.c.h.b16 %v576
        %v748 = vunpack.c.l.b16 %v577
        %v749 = vunpack.c.h.b16 %v577
        %v750 = vunpack.c.l.b16 %v578
        %v751 = vunpack.c.h.b16 %v578
        %v752 = vunpack.c.l.b16 %v579
        %v753 = vunpack.c.h.b16 %v579
        %v754 = vunpack.c.l.b16 %v580
        %v755 = vunpack.c.h.b16 %v580
        %v756 = vunpack.c.l.b16 %v581
        %v757 = vunpack.c.h.b16 %v581
        %v758 = vunpack.c.l.b16 %v582
        %v759 = vunpack.c.h.b16 %v582
        %v760 = vunpack.c.l.b16 %v583
        %v761 = vunpack.c.h.b16 %v583
        %v762 = vunpack.c.l.b16 %v584
        %v763 = vunpack.c.h.b16 %v584
        %v764 = vunpack.c.l.b16 %v585
        %v765 = vunpack.c.h.b16 %v585
        %v766 = vunpack.c.l.b16 %v586
        %v767 = vunpack.c.h.b16 %v586
        %v768 = vunpack.c.l.b16 %v587
        %v769 = vunpack.c.h.b16 %v587
        %v770 = vunpack.c.l.b16 %v588
        %v771 = vunpack.c.h.b16 %v588
        %v772 = vunpack.c.l.b16 %v589
        %v773 = vunpack.c.h.b16 %v589
        %v774 = vunpack.c.l.b16 %v590
        %v775 = vunpack.c.h.b16 %v590
        %v776 = vunpack.c.l.b16 %v591
        %v777 = vunpack.c.h.b16 %v591
        %v778 = vunpack.c.l.b16 %v592
        %v779 = vunpack.c.h.b16 %v592
        %v780 = vunpack.c.l.b16 %v593
        %v781 = vunpack.c.h.b16 %v593
        %v782 = vunpack.c.l.b16 %v594
        %v783 = vunpack.c.h.b16 %v594
        %v784 = vunpack.c.l.b16 %v595
        %v785 = vunpack.c.h.b16 %v595
        %v786 = vunpack.c.l.b16 %v596
        %v787 = vunpack.c.h.b16 %v596
        %v788 = vunpack.c.l.b16 %v597
        %v789 = vunpack.c.h.b16 %v597
        %v790 = vunpack.c.l.b16 %v598
        %v791 = vunpack.c.h.b16 %v598
        %v792 = vunpack.c.l.b16 %v599
        %v793 = vunpack.c.h.b16 %v599
        %v794 = vunpack.c.l.b16 %v600
        %v795 = vunpack.c.h.b16 %v600
        %v796 = vunpack.c.l.b16 %v601
        %v797 = vunpack.c.h.b16 %v601
        %v798 = vunpack.c.l.b16 %v602
        %v799 = vunpack.c.h.b16 %v602
        %v800 = vunpack.c.l.b16 %v603
        %v801 = vunpack.c.h.b16 %v603
        %v802 = vunpack.c.l.b16 %v604
        %v803 = vunpack.c.h.b16 %v604
        %v804 = vunpack.c.l.b16 %v605
        %v805 = vunpack.c.h.b16 %v605
        %v806 = vunpack.c.l.b16 %v606
        %v807 = vunpack.c.h.b16 %v606
        %v808 = vunpack.c.l.b16 %v607
        %v809 = vunpack.c.h.b16 %v607
        %v810 = vunpack.c.l.b16 %v608
        %v811 = vunpack.c.h.b16 %v608
        %v812 = vunpack.c.l.b16 %v609
        %v813 = vunpack.c.h.b16 %v609
        %v814 = vpack.c.b16 %v688, %v686
        %v815 = vpack.c.b16 %v689, %v687
        %v816 = vpack.c.b16 %v692, %v690
        %v817 = vpack.c.b16 %v693, %v691
        %v818 = vpack.c.b16 %v696, %v694
        %v819 = vpack.c.b16 %v697, %v695
        %v820 = vpack.c.b16 %v700, %v698
        %v821 = vpack.c.b16 %v701, %v699
        %v822 = vpack.c.b16 %v704, %v702
        %v823 = vpack.c.b16 %v705, %v703
        %v824 = vpack.c.b16 %v708, %v706
        %v825 = vpack.c.b16 %v709, %v707
        %v826 = vpack.c.b16 %v712, %v710
        %v827 = vpack.c.b16 %v713, %v711
        %v828 = vpack.c.b16 %v716, %v714
        %v829 = vpack.c.b16 %v717, %v715
        %v830 = vpack.c.b16 %v720, %v718
        %v831 = vpack.c.b16 %v721, %v719
        %v832 = vpack.c.b16 %v724, %v722
        %v833 = vpack.c.b16 %v725, %v723
        %v834 = vpack.c.b16 %v728, %v726
        %v835 = vpack.c.b16 %v729, %v727
        %v836 = vpack.c.b16 %v732, %v730
        %v837 = vpack.c.b16 %v733, %v731
        %v838 = vpack.c.b16 %v736, %v734
        %v839 = vpack.c.b16 %v737, %v735
        %v840 = vpack.c.b16 %v740, %v738
        %v841 = vpack.c.b16 %v741, %v739
        %v842 = vpack.c.b16 %v744, %v742
        %v843 = vpack.c.b16 %v745, %v743
        %v844 = vpack.c.b16 %v748, %v746
        %v845 = vpack.c.b16 %v749, %v747
        %v846 = vpack.c.b16 %v752, %v750
        %v847 = vpack.c.b16 %v753, %v751
        %v848 = vpack.c.b16 %v756, %v754
        %v849 = vpack.c.b16 %v757, %v755
        %v850 = vpack.c.b16 %v760, %v758
        %v851 = vpack.c.b16 %v761, %v759
        %v852 = vpack.c.b16 %v764, %v762
        %v853 = vpack.c.b16 %v765, %v763
        %v854 = vpack.c.b16 %v768, %v766
        %v855 = vpack.c.b16 %v769, %v767
        %v856 = vpack.c.b16 %v772, %v770
        %v857 = vpack.c.b16 %v773, %v771
        %v858 = vpack.c.b16 %v776, %v774
        %v859 = vpack.c.b16 %v777, %v775
        %v860 = vpack.c.b16 %v780, %v778
        %v861 = vpack.c.b16 %v781, %v779
        %v862 = vpack.c.b16 %v784, %v782
        %v863 = vpack.c.b16 %v785, %v783
        %v864 = vpack.c.b16 %v788, %v786
        %v865 = vpack.c.b16 %v789, %v787
        %v866 = vpack.c.b16 %v792, %v790
        %v867 = vpack.c.b16 %v793, %v791
        %v868 = vpack.c.b16 %v796, %v794
        %v869 = vpack.c.b16 %v797, %v795
        %v870 = vpack.c.b16 %v800, %v798
        %v871 = vpack.c.b16 %v801, %v799
        %v872 = vpack.c.b16 %v804, %v802
        %v873 = vpack.c.b16 %v805, %v803
        %v874 = vpack.c.b16 %v808, %v806
        %v875 = vpack.c.b16 %v809, %v807
        %v876 = vpack.c.b16 %v812, %v810
        %v877 = vpack.c.b16 %v813, %v811
        %942 = vmatprep.subr.bf16.mxu0 %v815
        %943 = vmatpush1.bf16.msra.mxu0 %v814
        %944 = vmatprep.subr.bf16.mxu0 %v817
        %945 = vmatpush1.bf16.msra.mxu0 %v816
        %946 = vmatprep.subr.bf16.mxu0 %v819
        %947 = vmatpush1.bf16.msra.mxu0 %v818
        %948 = vmatprep.subr.bf16.mxu0 %v821
        %949 = vmatpush1.bf16.msra.mxu0 %v820
        %950 = vmatprep.subr.bf16.mxu0 %v823
        %951 = vmatpush1.bf16.msra.mxu0 %v822
        %952 = vmatprep.subr.bf16.mxu0 %v825
        %953 = vmatpush1.bf16.msra.mxu0 %v824
        %954 = vmatprep.subr.bf16.mxu0 %v827
        %955 = vmatpush1.bf16.msra.mxu0 %v826
        %956 = vmatprep.subr.bf16.mxu0 %v829
        %957 = vmatpush1.bf16.msra.mxu0 %v828
        %958 = vmatprep.subr.bf16.mxu0 %v831
        %959 = vmatpush1.bf16.msra.mxu0 %v830
        %960 = vmatprep.subr.bf16.mxu0 %v833
        %961 = vmatpush1.bf16.msra.mxu0 %v832
        %962 = vmatprep.subr.bf16.mxu0 %v835
        %963 = vmatpush1.bf16.msra.mxu0 %v834
        %964 = vmatprep.subr.bf16.mxu0 %v837
        %965 = vmatpush1.bf16.msra.mxu0 %v836
        %966 = vmatprep.subr.bf16.mxu0 %v839
        %967 = vmatpush1.bf16.msra.mxu0 %v838
        %968 = vmatprep.subr.bf16.mxu0 %v841
        %969 = vmatpush1.bf16.msra.mxu0 %v840
        %970 = vmatprep.subr.bf16.mxu0 %v843
        %971 = vmatpush1.bf16.msra.mxu0 %v842
        %972 = vmatprep.subr.bf16.mxu0 %v845
        %973 = vmatpush1.bf16.msra.mxu0 %v844
        %974 = vmatprep.mubr.bf16.mxu0 %v539
        %975 = vmatmul.mubr.bf16.gmra.mrb[0].mxu0 %v538
        %v976 = vpop.f32.mrb[0].mxu0
        %v977 = vadd.f32 %v615, %v976
        %v978 = vpop.f32.mrb[0].mxu0
        %v979 = vadd.f32 %v619, %v978
        %v980 = vpop.f32.mrb[0].mxu0
        %v981 = vadd.f32 %v615, %v980
        %v982 = vpop.f32.mrb[0].mxu0
        %v983 = vadd.f32 %v619, %v982
        %984 = vmatprep.mubr.bf16.mxu0 %v543
        %985 = vmatmul.mubr.bf16.gmra.mrb[0].mxu0 %v542
        %v986 = vpop.f32.mrb[0].mxu0
        %v987 = vadd.f32 %v615, %v986
        %v988 = vpop.f32.mrb[0].mxu0
        %v989 = vadd.f32 %v619, %v988
        %v990 = vpop.f32.mrb[0].mxu0
        %v991 = vadd.f32 %v615, %v990
        %v992 = vpop.f32.mrb[0].mxu0
        %v993 = vadd.f32 %v619, %v992
        %994 = vdwg.mxu0
        %995 = vmatprep.subr.bf16.mxu0 %v847
        %996 = vmatpush1.bf16.msra.mxu0 %v846
        %997 = vmatprep.subr.bf16.mxu0 %v849
        %998 = vmatpush1.bf16.msra.mxu0 %v848
        %999 = vmatprep.subr.bf16.mxu0 %v851
        %1000 = vmatpush1.bf16.msra.mxu0 %v850
        %1001 = vmatprep.subr.bf16.mxu0 %v853
        %1002 = vmatpush1.bf16.msra.mxu0 %v852
        %1003 = vmatprep.subr.bf16.mxu0 %v855
        %1004 = vmatpush1.bf16.msra.mxu0 %v854
        %1005 = vmatprep.subr.bf16.mxu0 %v857
        %1006 = vmatpush1.bf16.msra.mxu0 %v856
        %1007 = vmatprep.subr.bf16.mxu0 %v859
        %1008 = vmatpush1.bf16.msra.mxu0 %v858
        %1009 = vmatprep.subr.bf16.mxu0 %v861
        %1010 = vmatpush1.bf16.msra.mxu0 %v860
        %1011 = vmatprep.subr.bf16.mxu0 %v863
        %1012 = vmatpush1.bf16.msra.mxu0 %v862
        %1013 = vmatprep.subr.bf16.mxu0 %v865
        %1014 = vmatpush1.bf16.msra.mxu0 %v864
        %1015 = vmatprep.subr.bf16.mxu0 %v867
        %1016 = vmatpush1.bf16.msra.mxu0 %v866
        %1017 = vmatprep.subr.bf16.mxu0 %v869
        %1018 = vmatpush1.bf16.msra.mxu0 %v868
        %1019 = vmatprep.subr.bf16.mxu0 %v871
        %1020 = vmatpush1.bf16.msra.mxu0 %v870
        %1021 = vmatprep.subr.bf16.mxu0 %v873
        %1022 = vmatpush1.bf16.msra.mxu0 %v872
        %1023 = vmatprep.subr.bf16.mxu0 %v875
        %1024 = vmatpush1.bf16.msra.mxu0 %v874
        %1025 = vmatprep.subr.bf16.mxu0 %v877
        %1026 = vmatpush1.bf16.msra.mxu0 %v876
        %1027 = vmatprep.mubr.bf16.mxu0 %v541
        %1028 = vmatmul.mubr.bf16.gmra.mrb[0].mxu0 %v540
        %v1029 = vpop.f32.mrb[0].mxu0
        %v1030 = vadd.f32 %v977, %v1029
        %v1031 = vpop.f32.mrb[0].mxu0
        %v1032 = vadd.f32 %v979, %v1031
        %v1033 = vpop.f32.mrb[0].mxu0
        %v1034 = vadd.f32 %v981, %v1033
        %v1035 = vpop.f32.mrb[0].mxu0
        %v1036 = vadd.f32 %v983, %v1035
        %1037 = vmatprep.mubr.bf16.mxu0 %v545
        %1038 = vmatmul.mubr.bf16.gmra.mrb[0].mxu0 %v544
        %v1039 = vpop.f32.mrb[0].mxu0
        %v1040 = vadd.f32 %v987, %v1039
        %v1041 = vpop.f32.mrb[0].mxu0
        %v1042 = vadd.f32 %v989, %v1041
        %v1043 = vpop.f32.mrb[0].mxu0
        %v1044 = vadd.f32 %v991, %v1043
        %v1045 = vpop.f32.mrb[0].mxu0
        %v1046 = vadd.f32 %v993, %v1045
        %1047 = vdwg.mxu0
        %v1048 = vmax.f32 %v1030, 0.0
        %v1049 = vmax.f32 %v1032, 0.0
        %v1050 = vmax.f32 %v1034, 0.0
        %v1051 = vmax.f32 %v1036, 0.0
        %v1052 = vmax.f32 %v1040, 0.0
        %v1053 = vmax.f32 %v1042, 0.0
        %v1054 = vmax.f32 %v1044, 0.0
        %v1055 = vmax.f32 %v1046, 0.0
        %v1056 = vpack.c.bf16 %v1050, %v1048
        %v1057 = vpack.c.bf16 %v1051, %v1049
        %v1058 = vpack.c.bf16 %v1054, %v1052
        %v1059 = vpack.c.bf16 %v1055, %v1053
        %v1060 = vld [vmem:[#allocation7] sm:$0xf]
        %v1061 = vld [vmem:[#allocation7 + $0x4] sm:$0xf]
        %v1062 = vld [vmem:[#allocation7 + $0x8] sm:$0xf]
        %v1063 = vld [vmem:[#allocation7 + $0xc] sm:$0xf]
        %v1064 = vld [vmem:[#allocation7 + $0x10] sm:$0xf]
        %v1065 = vld [vmem:[#allocation7 + $0x14] sm:$0xf]
        %v1066 = vld [vmem:[#allocation7 + $0x18] sm:$0xf]
        %v1067 = vld [vmem:[#allocation7 + $0x1c] sm:$0xf]
        %v1068 = vld [vmem:[#allocation7 + $0x20] sm:$0xf]
        %v1069 = vld [vmem:[#allocation7 + $0x24] sm:$0xf]
        %v1070 = vld [vmem:[#allocation7 + $0x28] sm:$0xf]
        %v1071 = vld [vmem:[#allocation7 + $0x2c] sm:$0xf]
        %v1072 = vld [vmem:[#allocation7 + $0x30] sm:$0xf]
        %v1073 = vld [vmem:[#allocation7 + $0x34] sm:$0xf]
        %v1074 = vld [vmem:[#allocation7 + $0x38] sm:$0xf]
        %v1075 = vld [vmem:[#allocation7 + $0x3c] sm:$0xf]
        %v1076 = vld [vmem:[#allocation7 + $0x40] sm:$0xf]
        %v1077 = vld [vmem:[#allocation7 + $0x44] sm:$0xf]
        %v1078 = vld [vmem:[#allocation7 + $0x48] sm:$0xf]
        %v1079 = vld [vmem:[#allocation7 + $0x4c] sm:$0xf]
        %v1080 = vld [vmem:[#allocation7 + $0x50] sm:$0xf]
        %v1081 = vld [vmem:[#allocation7 + $0x54] sm:$0xf]
        %v1082 = vld [vmem:[#allocation7 + $0x58] sm:$0xf]
        %v1083 = vld [vmem:[#allocation7 + $0x5c] sm:$0xf]
        %v1084 = vld [vmem:[#allocation7 + $0x60] sm:$0xf]
        %v1085 = vld [vmem:[#allocation7 + $0x64] sm:$0xf]
        %v1086 = vld [vmem:[#allocation7 + $0x68] sm:$0xf]
        %v1087 = vld [vmem:[#allocation7 + $0x6c] sm:$0xf]
        %v1088 = vld [vmem:[#allocation7 + $0x70] sm:$0xf]
        %v1089 = vld [vmem:[#allocation7 + $0x74] sm:$0xf]
        %v1090 = vld [vmem:[#allocation7 + $0x78] sm:$0xf]
        %v1091 = vld [vmem:[#allocation7 + $0x7c] sm:$0xf]
        %v1092 = vld [vmem:[%s6] sm:$0x1]
        %v1094 = vlaneseq
        %v1095 = vshrl.u32 %v1094, 7
        %v1096 = vsub.s32 0, %v1095
        %v1097 = vrot.slane %v1092, %v1096
        %v1131 = vunpack.c.l.b16 %v1060
        %v1132 = vunpack.c.l.b16 %v1061
        %v1133 = vunpack.c.l.b16 %v1062
        %v1134 = vunpack.c.l.b16 %v1063
        %v1135 = vunpack.c.l.b16 %v1064
        %v1136 = vunpack.c.l.b16 %v1065
        %v1137 = vunpack.c.l.b16 %v1066
        %v1138 = vunpack.c.l.b16 %v1067
        %v1139 = vunpack.c.l.b16 %v1068
        %v1140 = vunpack.c.l.b16 %v1069
        %v1141 = vunpack.c.l.b16 %v1070
        %v1142 = vunpack.c.l.b16 %v1071
        %v1143 = vunpack.c.l.b16 %v1072
        %v1144 = vunpack.c.l.b16 %v1073
        %v1145 = vunpack.c.l.b16 %v1074
        %v1146 = vunpack.c.l.b16 %v1075
        %v1147 = vunpack.c.l.b16 %v1076
        %v1148 = vunpack.c.l.b16 %v1077
        %v1149 = vunpack.c.l.b16 %v1078
        %v1150 = vunpack.c.l.b16 %v1079
        %v1151 = vunpack.c.l.b16 %v1080
        %v1152 = vunpack.c.l.b16 %v1081
        %v1153 = vunpack.c.l.b16 %v1082
        %v1154 = vunpack.c.l.b16 %v1083
        %v1155 = vunpack.c.l.b16 %v1084
        %v1156 = vunpack.c.l.b16 %v1085
        %v1157 = vunpack.c.l.b16 %v1086
        %v1158 = vunpack.c.l.b16 %v1087
        %v1159 = vunpack.c.l.b16 %v1088
        %v1160 = vunpack.c.l.b16 %v1089
        %v1161 = vunpack.c.l.b16 %v1090
        %v1162 = vunpack.c.l.b16 %v1091
        %v1163 = vpack.c.b16 %v1132, %v1131
        %v1164 = vpack.c.b16 %v1134, %v1133
        %v1165 = vpack.c.b16 %v1136, %v1135
        %v1166 = vpack.c.b16 %v1138, %v1137
        %v1167 = vpack.c.b16 %v1140, %v1139
        %v1168 = vpack.c.b16 %v1142, %v1141
        %v1169 = vpack.c.b16 %v1144, %v1143
        %v1170 = vpack.c.b16 %v1146, %v1145
        %v1171 = vpack.c.b16 %v1148, %v1147
        %v1172 = vpack.c.b16 %v1150, %v1149
        %v1173 = vpack.c.b16 %v1152, %v1151
        %v1174 = vpack.c.b16 %v1154, %v1153
        %v1175 = vpack.c.b16 %v1156, %v1155
        %v1176 = vpack.c.b16 %v1158, %v1157
        %v1177 = vpack.c.b16 %v1160, %v1159
        %v1178 = vpack.c.b16 %v1162, %v1161
        %1195 = vmatprep.subr.bf16.mxu0 0
        %1196 = vmatpush1.bf16.msra.mxu0 %v1163
        %1197 = vmatprep.subr.bf16.mxu0 0
        %1198 = vmatpush1.bf16.msra.mxu0 %v1164
        %1199 = vmatprep.subr.bf16.mxu0 0
        %1200 = vmatpush1.bf16.msra.mxu0 %v1165
        %1201 = vmatprep.subr.bf16.mxu0 0
        %1202 = vmatpush1.bf16.msra.mxu0 %v1166
        %1203 = vmatprep.subr.bf16.mxu0 0
        %1204 = vmatpush1.bf16.msra.mxu0 %v1167
        %1205 = vmatprep.subr.bf16.mxu0 0
        %1206 = vmatpush1.bf16.msra.mxu0 %v1168
        %1207 = vmatprep.subr.bf16.mxu0 0
        %1208 = vmatpush1.bf16.msra.mxu0 %v1169
        %1209 = vmatprep.subr.bf16.mxu0 0
        %1210 = vmatpush1.bf16.msra.mxu0 %v1170
        %1211 = vmatprep.subr.bf16.mxu0 0
        %1212 = vmatpush1.bf16.msra.mxu0 %v1171
        %1213 = vmatprep.subr.bf16.mxu0 0
        %1214 = vmatpush1.bf16.msra.mxu0 %v1172
        %1215 = vmatprep.subr.bf16.mxu0 0
        %1216 = vmatpush1.bf16.msra.mxu0 %v1173
        %1217 = vmatprep.subr.bf16.mxu0 0
        %1218 = vmatpush1.bf16.msra.mxu0 %v1174
        %1219 = vmatprep.subr.bf16.mxu0 0
        %1220 = vmatpush1.bf16.msra.mxu0 %v1175
        %1221 = vmatprep.subr.bf16.mxu0 0
        %1222 = vmatpush1.bf16.msra.mxu0 %v1176
        %1223 = vmatprep.subr.bf16.mxu0 0
        %1224 = vmatpush1.bf16.msra.mxu0 %v1177
        %1225 = vmatprep.subr.bf16.mxu0 0
        %1226 = vmatpush1.bf16.msra.mxu0 %v1178
        %1227 = vmatprep.mubr.bf16.mxu0 %v1057
        %1228 = vmatmul.mubr.bf16.gmra.mrb[0].mxu0 %v1056
        %v1229 = vpop.f32.mrb[0].mxu0
        %v1230 = vadd.f32 %v1097, %v1229
        %v1231 = vpop.f32.mrb[0].mxu0
        %v1232 = vpop.f32.mrb[0].mxu0
        %v1233 = vadd.f32 %v1097, %v1232
        %v1234 = vpop.f32.mrb[0].mxu0
        %1235 = vmatprep.mubr.bf16.mxu0 %v1059
        %1236 = vmatmul.mubr.bf16.gmra.mrb[0].mxu0 %v1058
        %v1237 = vpop.f32.mrb[0].mxu0
        %v1238 = vadd.f32 %v1097, %v1237
        %v1239 = vpop.f32.mrb[0].mxu0
        %v1240 = vpop.f32.mrb[0].mxu0
        %v1241 = vadd.f32 %v1097, %v1240
        %v1242 = vpop.f32.mrb[0].mxu0
        %1243 = vdwg.mxu0
        %v1244 = vxor.u32 %v1230, 2147483648
        %v1245 = vxor.u32 %v1233, 2147483648
        %v1246 = vxor.u32 %v1238, 2147483648
        %v1247 = vxor.u32 %v1241, 2147483648
        %v1248 = vmul.f32 %v1244, 1.442695
        %v1249 = vpow.pop %v1248
        %v1250 = vmul.f32 %v1245, 1.442695
        %v1251 = vpow.pop %v1250
        %v1252 = vmul.f32 %v1246, 1.442695
        %v1253 = vpow.pop %v1252
        %v1254 = vmul.f32 %v1247, 1.442695
        %v1255 = vpow.pop %v1254
        %v1256 = vadd.f32 %v1249, 1.0
        %v1257 = vadd.f32 %v1251, 1.0
        %v1258 = vadd.f32 %v1253, 1.0
        %v1259 = vadd.f32 %v1255, 1.0
        %v1260 = vrcp.pop %v1256
        %v1261 = vmul.f32 1.0, %v1260
        %v1262 = vrcp.pop %v1257
        %v1263 = vmul.f32 1.0, %v1262
        %v1264 = vrcp.pop %v1258
        %v1265 = vmul.f32 1.0, %v1264
        %v1266 = vrcp.pop %v1259
        %v1267 = vmul.f32 1.0, %v1266
        %1268 = vst [vmem:[%s316] sm:$0xff] %v1261
        %1269 = vst [vmem:[%s316 + $0x8] sm:$0xff] %v1263
        %1270 = vst [vmem:[%s316 + $0x10] sm:$0xff] %v1265
        %1271 = vst [vmem:[%s316 + $0x18] sm:$0xff] %v1267
        %s1272 = sand.u32 %s183, 1
        %s1273 = scalar_lea.sflag [#allocation4], %s1272
        %s1274 = sand.u32 %s183, 1
        %s1275 = smul.addr %s1274, 32
        %s1276 = scalar_lea.vmem [#allocation8], %s1275
        // Predicated region
        $region61: #{tpu_custom_call.1} parent=47 // pred_check
          %p1277 = pneg %p193
        $region62: #{tpu_custom_call.1} parent=47 // pred_check_branch
          %1279 = sbr.rel (%p1277) target = $region64
        $region63: #{tpu_custom_call.1} parent=47 // pred_region
          %s1280 = smul.u32 4, %s23
          %s1282 = ssub.s32 512, 512
          %1283 = vsyncadd %s1273, %s1282
          %s1284 = smul.addr %s1280, 128
          %s1285 = scalar_lea.hbm %s7, %s1284
          %s1286 = sshll.u32 %s1276, 4
          %s1287 = int_to_ptr.vmem [resolvable:$true] %s1286
          %1292 = dma.vmem_to_hbm [thread:$0]  %s1287, 512, %s1285, %s1273, 128, 128, 8
        $region64: #{tpu_custom_call.1} parent=47 // pred_fallthru
          _
      $region48: #{tpu_custom_call.1} parent=5 // pred_fallthru
        _
      %p1293 = scmp.le.s32.totalorder 2, %s18
      // Predicated region
      $region65: #{tpu_custom_call.1} parent=5 // pred_check
        %p1294 = pneg %p1293
      $region66: #{tpu_custom_call.1} parent=5 // pred_check_branch
        %1296 = sbr.rel (%p1294) target = $region68
      $region67: #{tpu_custom_call.1} parent=5 // pred_region
        %s1297 = ssub.s32 %s18, 2
        // Predicated region
        $region69: #{tpu_custom_call.1} parent=67 // pred_check
          %p1298 = pneg %p199
        $region70: #{tpu_custom_call.1} parent=67 // pred_check_branch
          %1300 = sbr.rel (%p1298) target = $region72
        $region71: #{tpu_custom_call.1} parent=67 // pred_region
          %s1301 = sand.u32 %s184, 1
          %s1302 = scalar_lea.sflag [#allocation4], %s1301
          %s1303 = sand.u32 %s184, 1
          %s1304 = smul.addr %s1303, 32
          %s1305 = scalar_lea.vmem [#allocation8], %s1304
          %1306 = dma.done %s1302, 512
        $region72: #{tpu_custom_call.1} parent=67 // pred_fallthru
          _
      $region68: #{tpu_custom_call.1} parent=5 // pred_fallthru
        _
    $region6: #{tpu_custom_call.1} parent=1 // loop_footer
      %s22 = sadd.s32 1, %s18
    $region7: #{tpu_custom_call.1} parent=1 // loop_footer_branch
      %17 = sbr.rel target = $region3
    $region8: #{tpu_custom_call.1} parent=1 // loop_exit
      _
    %1307 = vsyncpa [#allocation3], 1
    %s1308 = scalar_lea.sflag [#allocation3], 1
    %1309 = vsyncpa %s1308, 1
    %1310 = vsyncpa [#allocation6], 1
    %1311 = vsyncpa [#allocation4], 1
    %s1312 = scalar_lea.sflag [#allocation4], 1
    %1313 = vsyncpa %s1312, 1

</llo_original>
